<compile_context>
chip_gen: v6e
topology: v6e:2x2x1
jax: 0.10.0
libtpu: 0.0.40
codegen_flags: <defaults>
</compile_context>

<pallas_src>
from functools import partial

import jax
import jax.numpy as jnp
from jax.experimental import pallas as pl
from jax.experimental.pallas import tpu as pltpu


def _channel_pool_kernel(x_ref, o_ref, sum_acc, max_acc, *, total_s, tile_s):
    """x_ref: (C, TS) slab of the current batch element; o_ref: (2, C) pooled out."""
    k = pl.program_id(1)
    c = x_ref.shape[0]
    n_chunks = tile_s // 128
    ragged = (total_s % tile_s) != 0

    @pl.when(k == 0)
    def _init():
        sum_acc[...] = jnp.zeros_like(sum_acc)
        max_acc[...] = jnp.full_like(max_acc, -jnp.inf)

    if ragged:
        lane = jax.lax.broadcasted_iota(jnp.int32, (1, 128), 1)
        base = k * tile_s

    # Accumulate 128-lane column chunks: vreg-aligned loads + VPU add/max into the
    # (C, 128) VMEM accumulators.  No cross-lane (XLU) work in the hot loop.
    for j in range(n_chunks):
        chunk = x_ref[:, j * 128:(j + 1) * 128].astype(jnp.float32)  # (C, 128)
        if ragged:
            valid = (base + j * 128 + lane) < total_s                # (1, 128)
            c_sum = jnp.where(valid, chunk, 0.0)
            c_max = jnp.where(valid, chunk, -jnp.inf)
        else:
            c_sum = chunk
            c_max = chunk
        sum_acc[...] = sum_acc[...] + c_sum
        max_acc[...] = jnp.maximum(max_acc[...], c_max)

    # Single cross-lane reduce + lane-dense (2, C) store, only on the last S step.
    @pl.when(k == pl.num_programs(1) - 1)
    def _finalize():
        inv_s = jnp.float32(1.0 / total_s)
        avg = (jnp.sum(sum_acc[...], axis=-1) * inv_s).reshape(1, c)  # (1, C)
        mx = jnp.max(max_acc[...], axis=-1).reshape(1, c)             # (1, C)
        o_ref[...] = jnp.concatenate([avg, mx], axis=0).astype(o_ref.dtype)


def _pick_tile_s(c, s, itemsize):
    """Largest 128-multiple S tile whose double-buffered input slab fits VMEM."""
    try:
        vmem_cap = pltpu.get_tpu_info().vmem_capacity_bytes  # 128 MiB v5e/v6e, 64 MiB v7x
    except Exception:
        vmem_cap = 64 * 1024 * 1024
    # Budget for the 2x double-buffered input tile; leave plenty of headroom vs the
    # scoped VMEM limit (16/32/32 MiB default on v5e/v6e/v7x).
    budget = min(vmem_cap // 8, 16 * 1024 * 1024)
    s_pad = pl.cdiv(s, 128) * 128
    max_ts = max(128, (budget // (2 * c * itemsize)) // 128 * 128)
    return min(s_pad, max_ts)


def channel_attention(x, w1, w2, *, tile_s=None):
    """x: (N, C, D, H, W). w1: (C//ratio, C). w2: (C, C//ratio)."""
    N, C, D, H, W = x.shape
    S = D * H * W
    x_flat = x.reshape(N, C, S)
    itemsize = jnp.dtype(x.dtype).itemsize

    if tile_s is None:
        tile_s = _pick_tile_s(C, S, itemsize)
    assert tile_s % 128 == 0
    n_s_tiles = pl.cdiv(S, tile_s)

    kernel = partial(_channel_pool_kernel, total_s=S, tile_s=tile_s)

    pooled = pl.pallas_call(
        kernel,
        out_shape=jax.ShapeDtypeStruct((N, 2, C), jnp.float32),
        grid_spec=pltpu.PrefetchScalarGridSpec(
            num_scalar_prefetch=0,
            grid=(N, n_s_tiles),
            in_specs=[
                pl.BlockSpec((pl.Squeezed(), C, tile_s), lambda n, k: (n, 0, k)),
            ],
            out_specs=pl.BlockSpec((pl.Squeezed(), 2, C), lambda n, k: (n, 0, 0)),
            scratch_shapes=[
                pltpu.VMEM((C, 128), jnp.float32),  # running sum
                pltpu.VMEM((C, 128), jnp.float32),  # running max
            ],
        ),
        compiler_params=pltpu.CompilerParams(
            dimension_semantics=("parallel", "arbitrary"),
            vmem_limit_bytes=32 * 1024 * 1024,
        ),
        cost_estimate=pl.CostEstimate(
            flops=2 * N * C * S,
            transcendentals=0,
            bytes_accessed=N * C * S * itemsize + N * 2 * C * 4,
        ),
    )(x_flat)

    # Tiny shared-MLP epilogue in plain XLA, batched over N and over (avg, max).
    flat = pooled.reshape(N * 2, C)                        # (2N, C)
    h = flat @ w1.astype(jnp.float32).T                    # (2N, C//ratio)
    h = jnp.where(h >= 0, h, 0.2 * h)                      # LeakyReLU(0.2)
    y = (h @ w2.astype(jnp.float32).T).reshape(N, 2, C)    # (N, 2, C)
    out = jax.nn.sigmoid(y[:, 0] + y[:, 1]).astype(x.dtype)
    return out.reshape(N, C, 1, 1, 1)


def channel_attention_ref(x, w1, w2):
    # Pure-JAX reference mirroring the PyTorch forward.
    avg = jnp.mean(x, axis=(2, 3, 4))            # (N, C)
    mx = jnp.max(x, axis=(2, 3, 4))              # (N, C)

    def mlp(v):                                   # (N, C)
        h = v @ w1.T                              # (N, C//ratio)
        h = jnp.where(h >= 0, h, 0.2 * h)
        return h @ w2.T                           # (N, C)

    out = jax.nn.sigmoid(mlp(avg) + mlp(mx))      # (N, C)
    return out.reshape(*out.shape, 1, 1, 1)


if __name__ == "__main__":
    N, C, D, H, W = 2, 16, 4, 8, 8
    ratio = 8
    Hd = C // ratio

    key = jax.random.PRNGKey(0)
    kx, k1, k2 = jax.random.split(key, 3)

    x = jax.random.normal(kx, (N, C, D, H, W), dtype=jnp.float32)
    # Deterministic "Conv3d(..., 1, bias=False)" weights, squeezed from (out, in, 1, 1, 1)
    w1 = jax.random.normal(k1, (Hd, C), dtype=jnp.float32) * 0.1
    w2 = jax.random.normal(k2, (C, Hd), dtype=jnp.float32) * 0.1

    ref = channel_attention_ref(x, w1, w2)

    # Auto-sized S tile (single tile at this small shape).
    out = jax.block_until_ready(channel_attention(x, w1, w2))
    assert out.shape == (N, C, 1, 1, 1)
    assert jnp.allclose(out, ref, atol=1e-5, rtol=1e-5), "mismatch vs reference (auto tile)"

    # Forced 128-lane tile -> multi-step grid along S, exercises the running
    # sum/max accumulator init/finalize path.
    out2 = jax.block_until_ready(channel_attention(x, w1, w2, tile_s=128))
    assert jnp.allclose(out2, ref, atol=1e-5, rtol=1e-5), "mismatch vs reference (tiled S)"

    print("KERNEL_OK")
</pallas_src>

<mosaic_0001>
module attributes {stable_mosaic.version = 11 : i64} {
  func.func @_channel_pool_kernel(%arg0: i32, %arg1: i32, %arg2: memref<1x16x256xf32, #tpu.memory_space<vmem>>, %arg3: memref<1x2x16xf32, #tpu.memory_space<vmem>>, %arg4: memref<16x128xf32, #tpu.memory_space<vmem>>, %arg5: memref<16x128xf32, #tpu.memory_space<vmem>>) attributes {dimension_semantics = [#tpu.dimension_semantics<parallel>, #tpu.dimension_semantics<arbitrary>], iteration_bounds = array<i64: 2, 1>, scalar_prefetch = 0 : i64, scratch_operands = 2 : i64, tpu.core_type = #tpu.core_type<tc>, window_params = [{transform_indices = @transform_0, window_bounds = array<i64: 1, 16, 256>}, {transform_indices = @transform_1, window_bounds = array<i64: 1, 2, 16>}]} {
    %c0_i32 = arith.constant 0 : i32
    %0 = arith.cmpi eq, %arg1, %c0_i32 : i32
    %1 = arith.extui %0 : i1 to i32
    %c0_i32_0 = arith.constant 0 : i32
    %2 = arith.cmpi ne, %1, %c0_i32_0 : i32
    scf.if %2 {
      %cst = arith.constant 0.000000e+00 : f32
      %22 = vector.broadcast %cst : f32 to vector<16x128xf32>
      %c0_23 = arith.constant 0 : index
      %c0_24 = arith.constant 0 : index
      %23 = vector.load %arg4[%c0_23, %c0_24] : memref<16x128xf32, #tpu.memory_space<vmem>>, vector<16x128xf32>
      tpu.vector_store %arg4[%c0_23, %c0_24], %22 {strides = array<i32>} : memref<16x128xf32, #tpu.memory_space<vmem>>, vector<16x128xf32>,
      %cst_25 = arith.constant 0xFF800000 : f32
      %24 = vector.broadcast %cst_25 : f32 to vector<16x128xf32>
      %c0_26 = arith.constant 0 : index
      %c0_27 = arith.constant 0 : index
      %25 = vector.load %arg5[%c0_26, %c0_27] : memref<16x128xf32, #tpu.memory_space<vmem>>, vector<16x128xf32>
      tpu.vector_store %arg5[%c0_26, %c0_27], %24 {strides = array<i32>} : memref<16x128xf32, #tpu.memory_space<vmem>>, vector<16x128xf32>,
    } else {
    }
    %c0 = arith.constant 0 : index
    %c0_1 = arith.constant 0 : index
    %c0_2 = arith.constant 0 : index
    %3 = vector.load %arg2[%c0, %c0_1, %c0_2] : memref<1x16x256xf32, #tpu.memory_space<vmem>>, vector<1x16x128xf32>
    %4 = vector.shape_cast %3 : vector<1x16x128xf32> to vector<16x128xf32>
    %c0_3 = arith.constant 0 : index
    %c0_4 = arith.constant 0 : index
    %5 = vector.load %arg4[%c0_3, %c0_4] : memref<16x128xf32, #tpu.memory_space<vmem>>, vector<16x128xf32>
    %6 = arith.addf %5, %4 : vector<16x128xf32>
    %c0_5 = arith.constant 0 : index
    %c0_6 = arith.constant 0 : index
    %7 = vector.load %arg4[%c0_5, %c0_6] : memref<16x128xf32, #tpu.memory_space<vmem>>, vector<16x128xf32>
    tpu.vector_store %arg4[%c0_5, %c0_6], %6 {strides = array<i32>} : memref<16x128xf32, #tpu.memory_space<vmem>>, vector<16x128xf32>,
    %c0_7 = arith.constant 0 : index
    %c0_8 = arith.constant 0 : index
    %8 = vector.load %arg5[%c0_7, %c0_8] : memref<16x128xf32, #tpu.memory_space<vmem>>, vector<16x128xf32>
    %9 = arith.maximumf %8, %4 : vector<16x128xf32>
    %c0_9 = arith.constant 0 : index
    %c0_10 = arith.constant 0 : index
    %10 = vector.load %arg5[%c0_9, %c0_10] : memref<16x128xf32, #tpu.memory_space<vmem>>, vector<16x128xf32>
    tpu.vector_store %arg5[%c0_9, %c0_10], %9 {strides = array<i32>} : memref<16x128xf32, #tpu.memory_space<vmem>>, vector<16x128xf32>,
    %c0_11 = arith.constant 0 : index
    %c0_12 = arith.constant 0 : index
    %c128 = arith.constant 128 : index
    %11 = vector.load %arg2[%c0_11, %c0_12, %c128] : memref<1x16x256xf32, #tpu.memory_space<vmem>>, vector<1x16x128xf32>
    %12 = vector.shape_cast %11 : vector<1x16x128xf32> to vector<16x128xf32>
    %c0_13 = arith.constant 0 : index
    %c0_14 = arith.constant 0 : index
    %13 = vector.load %arg4[%c0_13, %c0_14] : memref<16x128xf32, #tpu.memory_space<vmem>>, vector<16x128xf32>
    %14 = arith.addf %13, %12 : vector<16x128xf32>
    %c0_15 = arith.constant 0 : index
    %c0_16 = arith.constant 0 : index
    %15 = vector.load %arg4[%c0_15, %c0_16] : memref<16x128xf32, #tpu.memory_space<vmem>>, vector<16x128xf32>
    tpu.vector_store %arg4[%c0_15, %c0_16], %14 {strides = array<i32>} : memref<16x128xf32, #tpu.memory_space<vmem>>, vector<16x128xf32>,
    %c0_17 = arith.constant 0 : index
    %c0_18 = arith.constant 0 : index
    %16 = vector.load %arg5[%c0_17, %c0_18] : memref<16x128xf32, #tpu.memory_space<vmem>>, vector<16x128xf32>
    %17 = arith.maximumf %16, %12 : vector<16x128xf32>
    %c0_19 = arith.constant 0 : index
    %c0_20 = arith.constant 0 : index
    %18 = vector.load %arg5[%c0_19, %c0_20] : memref<16x128xf32, #tpu.memory_space<vmem>>, vector<16x128xf32>
    tpu.vector_store %arg5[%c0_19, %c0_20], %17 {strides = array<i32>} : memref<16x128xf32, #tpu.memory_space<vmem>>, vector<16x128xf32>,
    %c0_i32_21 = arith.constant 0 : i32
    %19 = arith.cmpi eq, %arg1, %c0_i32_21 : i32
    %20 = arith.extui %19 : i1 to i32
    %c0_i32_22 = arith.constant 0 : i32
    %21 = arith.cmpi ne, %20, %c0_i32_22 : i32
    scf.if %21 {
      %c0_23 = arith.constant 0 : index
      %c0_24 = arith.constant 0 : index
      %22 = vector.load %arg4[%c0_23, %c0_24] : memref<16x128xf32, #tpu.memory_space<vmem>>, vector<16x128xf32>
      %cst = arith.constant dense<0.000000e+00> : vector<16xf32>
      %23 = vector.multi_reduction <add>, %22, %cst [1] : vector<16x128xf32> to vector<16xf32>
      %cst_25 = arith.constant 3.906250e-03 : f32
      %24 = vector.broadcast %cst_25 : f32 to vector<16xf32>
      %25 = arith.mulf %23, %24 : vector<16xf32>
      %26 = vector.shape_cast %25 : vector<16xf32> to vector<1x16xf32>
      %c0_26 = arith.constant 0 : index
      %c0_27 = arith.constant 0 : index
      %27 = vector.load %arg5[%c0_26, %c0_27] : memref<16x128xf32, #tpu.memory_space<vmem>>, vector<16x128xf32>
      %cst_28 = arith.constant dense<0xFF800000> : vector<16xf32>
      %28 = vector.multi_reduction <maximumf>, %27, %cst_28 [1] : vector<16x128xf32> to vector<16xf32>
      %29 = vector.shape_cast %28 : vector<16xf32> to vector<1x16xf32>
      %30 = tpu.concatenate %26, %29 in 0 : vector<1x16xf32>, vector<1x16xf32> -> vector<2x16xf32>
      %c0_29 = arith.constant 0 : index
      %c0_30 = arith.constant 0 : index
      %c0_31 = arith.constant 0 : index
      %31 = vector.load %arg3[%c0_29, %c0_30, %c0_31] : memref<1x2x16xf32, #tpu.memory_space<vmem>>, vector<1x2x16xf32>
      %32 = vector.shape_cast %31 : vector<1x2x16xf32> to vector<2x16xf32>
      %33 = vector.shape_cast %30 : vector<2x16xf32> to vector<1x2x16xf32>
      tpu.vector_store %arg3[%c0_29, %c0_30, %c0_31], %33 {strides = array<i32>} : memref<1x2x16xf32, #tpu.memory_space<vmem>>, vector<1x2x16xf32>,
    } else {
    }
    return
  }
  func.func @transform_0(%arg0: i32, %arg1: i32) -> (i32, i32, i32) {
    %c0_i32 = arith.constant 0 : i32
    %c0_i32_0 = arith.constant 0 : i32
    return %arg0, %c0_i32, %arg1 : i32, i32, i32
  }
  func.func @transform_1(%arg0: i32, %arg1: i32) -> (i32, i32, i32) {
    %c0_i32 = arith.constant 0 : i32
    %c0_i32_0 = arith.constant 0 : i32
    %c0_i32_1 = arith.constant 0 : i32
    return %arg0, %c0_i32, %c0_i32_0 : i32, i32, i32
  }
}

</mosaic_0001>

<llo_original>
// kernel: tpu_custom_call.1
$region0: #{tpu_custom_call.1}
  #allocation0 [shape = 'u32[]', space=smem, size = 0x4, offset = 0x4, fixed_abs, tag = 'smem constant byte address 0x4 - core index']
  #allocation1 [shape = 'u32[144,128]{1,0:T(1,128)}', space=vmem, size = 0x12000, scoped, tag = 'internal scratch']
  #allocation2 [shape = 'f32[16,128]{1,0:T(8,128)}', space=vmem, size = 0x2000, scoped, tag = 'scratch operand']
  #allocation3 [shape = 'f32[16,128]{1,0:T(8,128)}', space=vmem, size = 0x2000, scoped, tag = 'scratch operand']
  %s0 = inlined_call_operand.hbm [shape: f32[2,16,256], index: 0, kind: input, shape index: {}]
  %s1 = inlined_call_operand.hbm [shape: f32[2,2,16], index: 1, kind: output, shape index: {}]
  %s2 = sld [smem:[#allocation0]]
  $region49: #{tpu_custom_call.1} parent=0
    _
  %s4 = ssub.s32 1, %s2
  %s5 = scalar_select 0, %s4, %s2
  $region1: #{tpu_custom_call.1} parent=0
    #allocation4 [shape = 'u8[32768]{0}', space=vmem, size = 0x8000, scoped, tag = 'input window, operand 0']
    #allocation5 [shape = 's32[2]{0}', space=sflag, size = 0x8, scoped, tag = 'scoped memory for tpu_custom_call.1']
    #allocation6 [shape = 's32[2]{0}', space=sflag, size = 0x8, scoped, tag = 'scoped memory for tpu_custom_call.1']
    #allocation7 [shape = 'u8[2048]{0}', space=vmem, size = 0x800, scoped, tag = 'output window, operand 0']
    %6 = vsyncpa [#allocation5], 0
    %s7 = scalar_lea.sflag [#allocation5], 1
    %8 = vsyncpa %s7, 0
    %9 = vsyncpa [#allocation6], 0
    %s10 = scalar_lea.sflag [#allocation6], 1
    %11 = vsyncpa %s10, 0
    loop: start=0, step=1, limit=4
    $region2: #{tpu_custom_call.1} parent=1 // loop_pre_header
      _
    $region3: #{tpu_custom_call.1} parent=1 // loop_header
      %s13 = sphi 0, %s17
      %p14 = scmp.ge.s32.totalorder %s13, 4
      %s20 = sphi 0, %s32
      %s21 = sphi 0, %s28
      %s22 = sphi 0, %s20
      %s23 = sphi 0, %s21
      %s24 = sphi 0, %s22
      %s25 = sphi 0, %s23
      %s37 = sphi 0, %s39
      %s40 = sphi 0, %s37
      %s41 = sphi 0, %s40
      %s57 = sphi 0, %s41
      %s63 = sphi 0, %s65
      %s66 = sphi 0, %s63
      %s67 = sphi 0, %s66
      %s83 = sphi 0, %s67
    $region4: #{tpu_custom_call.1} parent=1 // loop_header_branch
      %16 = sbr.rel (%p14) target = $region8
    $region5: #{tpu_custom_call.1} parent=1 // loop_body
      %s18 = ssub.s32 %s13, 1
      %s19 = ssub.s32 %s13, 2
      %s26 = sadd.s32 1, %s21
      %p27 = scmp.ge.s32.totalorder %s26, 1
      %s28 = scalar_select %p27, 0, %s26
      %s29 = sadd.s32 1, %s20
      %s30 = scalar_select %p27, %s29, %s20
      %p31 = scmp.ge.s32.totalorder %s30, 2
      %s32 = scalar_select %p31, 0, %s30
      %s33 = ssub.s32 %s20, %s32
      %s34 = ssub.s32 %s21, %s28
      %s35 = sor.u32 %s33, %s34
      %p36 = scmp.eq.s32.totalorder %s35, 0
      %s38 = sadd.s32 %s37, 1
      %s39 = scalar_select %p36, %s37, %s38
      %p42 = pneg %p36
      %p43 = scmp.eq.s32.totalorder %s13, 1
      %p44 = por %p42, %p43
      %p45 = scmp.ne.s32.totalorder %s37, %s40
      %p46 = scmp.eq.s32.totalorder %s13, 0
      %p47 = por %p45, %p46
      %p48 = scmp.ne.s32.totalorder %s37, %s40
      %p49 = scmp.eq.s32.totalorder %s18, 1
      %p50 = por %p48, %p49
      %p51 = scmp.ne.s32.totalorder %s40, %s41
      %p52 = scmp.eq.s32.totalorder %s18, 0
      %p53 = por %p51, %p52
      %p54 = scmp.ne.s32.totalorder %s40, %s41
      %p55 = scmp.eq.s32.totalorder %s19, 1
      %p56 = por %p54, %p55
      %p58 = scmp.ne.s32.totalorder %s41, %s57
      %p59 = scmp.eq.s32.totalorder %s19, 0
      %p60 = por %p58, %p59
      %s61 = ssub.s32 %s20, %s32
      %p62 = scmp.eq.s32.totalorder %s61, 0
      %s64 = sadd.s32 %s63, 1
      %s65 = scalar_select %p62, %s63, %s64
      %p68 = pneg %p62
      %p69 = scmp.eq.s32.totalorder %s13, 1
      %p70 = por %p68, %p69
      %p71 = scmp.ne.s32.totalorder %s63, %s66
      %p72 = scmp.eq.s32.totalorder %s13, 0
      %p73 = por %p71, %p72
      %p74 = scmp.ne.s32.totalorder %s63, %s66
      %p75 = scmp.eq.s32.totalorder %s18, 1
      %p76 = por %p74, %p75
      %p77 = scmp.ne.s32.totalorder %s66, %s67
      %p78 = scmp.eq.s32.totalorder %s18, 0
      %p79 = por %p77, %p78
      %p80 = scmp.ne.s32.totalorder %s66, %s67
      %p81 = scmp.eq.s32.totalorder %s19, 1
      %p82 = por %p80, %p81
      %p84 = scmp.ne.s32.totalorder %s67, %s83
      %p85 = scmp.eq.s32.totalorder %s19, 0
      %p86 = por %p84, %p85
      %p87 = scmp.le.s32.totalorder 1, %s13
      %p88 = scmp.lt.s32.totalorder %s13, 3
      %p89 = pnand %p87, %p88
      %p90 = pneg %p89
      // Predicated region
      $region9: #{tpu_custom_call.1} parent=5 // pred_check
        _
      $region10: #{tpu_custom_call.1} parent=5 // pred_check_branch
        %92 = sbr.rel (%p89) target = $region12
      $region11: #{tpu_custom_call.1} parent=5 // pred_region
        %s93 = ssub.s32 %s13, 1
      $region12: #{tpu_custom_call.1} parent=5 // pred_fallthru
        _
      %p94 = scmp.lt.s32.totalorder %s13, 2
      // Predicated region
      $region13: #{tpu_custom_call.1} parent=5 // pred_check
        %p95 = pneg %p94
      $region14: #{tpu_custom_call.1} parent=5 // pred_check_branch
        %97 = sbr.rel (%p95) target = $region16
      $region15: #{tpu_custom_call.1} parent=5 // pred_region
        // Predicated region
        $region17: #{tpu_custom_call.1} parent=15 // pred_check
          %p98 = pneg %p47
        $region18: #{tpu_custom_call.1} parent=15 // pred_check_branch
          %100 = sbr.rel (%p98) target = $region20
        $region19: #{tpu_custom_call.1} parent=15 // pred_region
          %s101 = sand.u32 %s37, 1
          %s102 = scalar_lea.sflag [#allocation5], %s101
          %s103 = sand.u32 %s37, 1
          %s104 = smul.addr %s103, 32
          %s105 = scalar_lea.vmem [#allocation4], %s104
          %s106 = smul.u32 2, %s21
          %s108 = ssub.s32 512, 512
          %109 = vsyncadd %s102, %s108
          %s110 = smul.addr %s20, 4
          %s111 = sadd.s32 %s106, %s110
          %s112 = smul.addr %s111, 128
          %s113 = scalar_lea.hbm %s0, %s112
          %s114 = sshll.u32 %s105, 4
          %s115 = int_to_ptr.vmem [resolvable:$true] %s114
          %120 = dma.hbm_to_vmem [thread:$0]  %s113, 512, %s115, %s102, 256, 256, 16
        $region20: #{tpu_custom_call.1} parent=15 // pred_fallthru
          _
      $region16: #{tpu_custom_call.1} parent=5 // pred_fallthru
        _
      %p121 = scmp.le.s32.totalorder 1, %s13
      %p122 = scmp.lt.s32.totalorder %s13, 3
      %p123 = pnand %p121, %p122
      %p124 = pneg %p123
      // Predicated region
      $region21: #{tpu_custom_call.1} parent=5 // pred_check
        _
      $region22: #{tpu_custom_call.1} parent=5 // pred_check_branch
        %126 = sbr.rel (%p123) target = $region24
      $region23: #{tpu_custom_call.1} parent=5 // pred_region
        %s127 = ssub.s32 %s13, 1
        %s128 = sand.u32 %s40, 1
        %s129 = scalar_lea.sflag [#allocation5], %s128
        %s130 = sand.u32 %s40, 1
        %s131 = smul.addr %s130, 32
        %s132 = scalar_lea.vmem [#allocation4], %s131
        // Predicated region
        $region25: #{tpu_custom_call.1} parent=23 // pred_check
          %p133 = pneg %p53
        $region26: #{tpu_custom_call.1} parent=23 // pred_check_branch
          %135 = sbr.rel (%p133) target = $region28
        $region27: #{tpu_custom_call.1} parent=23 // pred_region
          %136 = dma.done %s129, 512
        $region28: #{tpu_custom_call.1} parent=23 // pred_fallthru
          _
        %s137 = sand.u32 %s40, 1
        %s138 = scalar_lea.sflag [#allocation5], %s137
        %s139 = sand.u32 %s40, 1
        %s140 = smul.addr %s139, 32
        %s141 = scalar_lea.vmem [#allocation4], %s140
        %p142 = pneg %p53
        %p143 = pneg %p50
        %p144 = pneg %p79
        %p145 = pneg %p76
        %s146 = sand.u32 %s66, 1
        %s147 = scalar_lea.sflag [#allocation6], %s146
        %s148 = sand.u32 %s66, 1
        %s149 = smul.addr %s148, 2
        %s150 = scalar_lea.vmem [#allocation7], %s149
        %s151 = smul.u32 2, %s23
        %p152 = scmp.eq.s32.totalorder %s23, 0
        // Predicated region
        $region29: #{tpu_custom_call.1} parent=23 // pred_check
          %p153 = pneg %p152
        $region30: #{tpu_custom_call.1} parent=23 // pred_check_branch
          %155 = sbr.rel (%p153) target = $region32
        $region31: #{tpu_custom_call.1} parent=23 // pred_region
          %156 = vst [vmem:[#allocation2] sm:$0xff] 0.0
          %157 = vst [vmem:[#allocation2 + $0x8] sm:$0xff] 0.0
          %158 = vst [vmem:[#allocation3] sm:$0xff] -inf
          %159 = vst [vmem:[#allocation3 + $0x8] sm:$0xff] -inf
        $region32: #{tpu_custom_call.1} parent=23 // pred_fallthru
          _
        %v160 = vld [vmem:[%s132] sm:$0xff]
        %v161 = vld [vmem:[%s132 + $0x10] sm:$0xff]
        %v162 = vld [vmem:[#allocation2] sm:$0xff]
        %v163 = vld [vmem:[#allocation2 + $0x8] sm:$0xff]
        %v164 = vadd.f32 %v162, %v160
        %v165 = vadd.f32 %v163, %v161
        %166 = vst [vmem:[#allocation2] sm:$0xff] %v164
        %167 = vst [vmem:[#allocation2 + $0x8] sm:$0xff] %v165
        %v168 = vld [vmem:[#allocation3] sm:$0xff]
        %v169 = vld [vmem:[#allocation3 + $0x8] sm:$0xff]
        %v170 = vmax.f32 %v168, %v160
        %v171 = vmax.f32 %v169, %v161
        %172 = vst [vmem:[#allocation3] sm:$0xff] %v170
        %173 = vst [vmem:[#allocation3 + $0x8] sm:$0xff] %v171
        %v174 = vld [vmem:[%s132 + $0x8] sm:$0xff]
        %v175 = vld [vmem:[%s132 + $0x18] sm:$0xff]
        %v176 = vld [vmem:[#allocation2] sm:$0xff]
        %v177 = vld [vmem:[#allocation2 + $0x8] sm:$0xff]
        %v178 = vadd.f32 %v176, %v174
        %v179 = vadd.f32 %v177, %v175
        %180 = vst [vmem:[#allocation2] sm:$0xff] %v178
        %181 = vst [vmem:[#allocation2 + $0x8] sm:$0xff] %v179
        %v182 = vld [vmem:[#allocation3] sm:$0xff]
        %v183 = vld [vmem:[#allocation3 + $0x8] sm:$0xff]
        %v184 = vmax.f32 %v182, %v174
        %v185 = vmax.f32 %v183, %v175
        %186 = vst [vmem:[#allocation3] sm:$0xff] %v184
        %187 = vst [vmem:[#allocation3 + $0x8] sm:$0xff] %v185
        // Predicated region
        $region33: #{tpu_custom_call.1} parent=23 // pred_check
          %p188 = pneg %p152
        $region34: #{tpu_custom_call.1} parent=23 // pred_check_branch
          %190 = sbr.rel (%p188) target = $region36
        $region35: #{tpu_custom_call.1} parent=23 // pred_region
          %v191 = vld [vmem:[#allocation2] sm:$0xff]
          %v192 = vld [vmem:[#allocation2 + $0x8] sm:$0xff]
          %193 = vadd.xlane.f32.xlu0 %v191
          %v194 = vpop.xlane.xlu0 %193
          %195 = vadd.xlane.f32.xlu0 %v192
          %v196 = vpop.xlane.xlu0 %195
          %v197 = vmul.f32 %v194, 0.00390625
          %v198 = vmul.f32 %v196, 0.00390625
          %v199 = vld [vmem:[#allocation3] sm:$0xff]
          %v200 = vld [vmem:[#allocation3 + $0x8] sm:$0xff]
          %201 = vmax.xlane.f32.xlu0 %v199
          %v202 = vpop.xlane.xlu0 %201
          %203 = vmax.xlane.f32.xlu0 %v200
          %v204 = vpop.xlane.xlu0 %203
          %v207 = vlaneseq
          %v208 = vand.u32 %v207, 127
          %v209 = vlaneseq
          %v210 = vshrl.u32 %v209, 7
          %v211 = vsub.s32 %v208, %v210
          %v212 = vrot.slane %v197, %v211
          %v213 = vadd.s32 %v208, 4294967288
          %v214 = vlaneseq
          %v215 = vshrl.u32 %v214, 7
          %v216 = vsub.s32 %v213, %v215
          %v217 = vrot.slane %v198, %v216
          %vm218 = vcmask 130112
          %v219 = vsel %vm218, %v217, %v212
          %v223 = vlaneseq
          %v224 = vshrl.u32 %v223, 7
          %v225 = vsub.s32 %v208, %v224
          %v226 = vrot.slane %v202, %v225
          %v227 = vlaneseq
          %v228 = vshrl.u32 %v227, 7
          %v229 = vsub.s32 %v213, %v228
          %v230 = vrot.slane %v204, %v229
          %v231 = vsel %vm218, %v230, %v226
          %vm233 = vcmask 1040384
          %v234 = vsel %vm233, %v219, %v231
          %vm235 = vcmask 123904
          %236 = vst.msk [vmem:[%s150] sm:$0x3] %vm235, %v234
        $region36: #{tpu_custom_call.1} parent=23 // pred_fallthru
          _
        %s237 = sand.u32 %s66, 1
        %s238 = scalar_lea.sflag [#allocation6], %s237
        %s239 = sand.u32 %s66, 1
        %s240 = smul.addr %s239, 2
        %s241 = scalar_lea.vmem [#allocation7], %s240
        // Predicated region
        $region37: #{tpu_custom_call.1} parent=23 // pred_check
          %p242 = pneg %p76
        $region38: #{tpu_custom_call.1} parent=23 // pred_check_branch
          %244 = sbr.rel (%p242) target = $region40
        $region39: #{tpu_custom_call.1} parent=23 // pred_region
          %s246 = ssub.s32 32, 32
          %247 = vsyncadd %s238, %s246
          %s248 = smul.addr %s22, 32
          %s249 = scalar_lea.hbm %s1, %s248
          %s251 = sshll.u32 %s241, 4
          %s252 = int_to_ptr.vmem [resolvable:$true] %s251
          %254 = dma.vmem_to_hbm [thread:$0]  %s252, 32, %s249, %s238
        $region40: #{tpu_custom_call.1} parent=23 // pred_fallthru
          _
      $region24: #{tpu_custom_call.1} parent=5 // pred_fallthru
        _
      %p255 = scmp.le.s32.totalorder 2, %s13
      // Predicated region
      $region41: #{tpu_custom_call.1} parent=5 // pred_check
        %p256 = pneg %p255
      $region42: #{tpu_custom_call.1} parent=5 // pred_check_branch
        %258 = sbr.rel (%p256) target = $region44
      $region43: #{tpu_custom_call.1} parent=5 // pred_region
        %s259 = ssub.s32 %s13, 2
        // Predicated region
        $region45: #{tpu_custom_call.1} parent=43 // pred_check
          %p260 = pneg %p82
        $region46: #{tpu_custom_call.1} parent=43 // pred_check_branch
          %262 = sbr.rel (%p260) target = $region48
        $region47: #{tpu_custom_call.1} parent=43 // pred_region
          %s263 = sand.u32 %s67, 1
          %s264 = scalar_lea.sflag [#allocation6], %s263
          %s265 = sand.u32 %s67, 1
          %s266 = smul.addr %s265, 2
          %s267 = scalar_lea.vmem [#allocation7], %s266
          %268 = dma.done %s264, 32
        $region48: #{tpu_custom_call.1} parent=43 // pred_fallthru
          _
      $region44: #{tpu_custom_call.1} parent=5 // pred_fallthru
        _
    $region6: #{tpu_custom_call.1} parent=1 // loop_footer
      %s17 = sadd.s32 1, %s13
    $region7: #{tpu_custom_call.1} parent=1 // loop_footer_branch
      %12 = sbr.rel target = $region3
    $region8: #{tpu_custom_call.1} parent=1 // loop_exit
      _
    %269 = vsyncpa [#allocation5], 1
    %s270 = scalar_lea.sflag [#allocation5], 1
    %271 = vsyncpa %s270, 1
    %272 = vsyncpa [#allocation6], 1
    %s273 = scalar_lea.sflag [#allocation6], 1
    %274 = vsyncpa %s273, 1

</llo_original>
